<compile_context>
chip_gen: v6e
topology: v6e:2x2x1
jax: 0.10.0
libtpu: 0.0.40
codegen_flags: <defaults>
</compile_context>

<pallas_src>
import functools

import jax
import jax.numpy as jnp
from jax import lax
from jax.experimental import pallas as pl
from jax.experimental.pallas import tpu as pltpu

LANE = 128  # TPU lane width (last-dim tiling unit)


# ---------------------------------------------------------------------------
# Small helpers
# ---------------------------------------------------------------------------

def _round_up(x, m):
    return ((x + m - 1) // m) * m


def _divisors_desc(n):
    return [d for d in range(n, 0, -1) if n % d == 0]


def _vmem_limit_bytes():
    """Per-generation scoped-VMEM limit (~75% of physical capacity)."""
    cap = 0
    try:
        cap = int(getattr(pltpu.get_tpu_info(), "vmem_capacity_bytes", 0) or 0)
    except Exception:
        cap = 0
    if cap <= 0:
        cap = 64 * 1024 * 1024  # v7x-safe fallback; also valid on v5e/v6e.
    return cap * 3 // 4


# ---------------------------------------------------------------------------
# In-kernel building blocks
# ---------------------------------------------------------------------------

def _accumulate_slices(x_ref, acc_ref, n_slices):
    """acc_ref (btile, C, 128) f32 += sum of n_slices 128-lane slices of x_ref.

    VPU adds only; the single cross-lane (XLU) reduce is deferred to the caller.
    """
    def body(k, carry):
        off = pl.multiple_of(k * LANE, LANE)
        acc_ref[...] += x_ref[:, :, pl.ds(off, LANE)].astype(jnp.float32)
        return carry

    lax.fori_loop(0, n_slices, body, 0, unroll=min(8, n_slices))


def _apply_scale_slices(x_ref, o_ref, s, n_slices):
    """o = x * s[..., None], computed in f32 on 128-lane slices (bounded temps)."""
    bt, C, _ = x_ref.shape
    # Hoist the broadcast out of the loop (JAX does not CSE broadcast_in_dim).
    s_b = jnp.broadcast_to(s[:, :, None].astype(jnp.float32), (bt, C, LANE))

    def body(k, carry):
        off = pl.multiple_of(k * LANE, LANE)
        idx = pl.ds(off, LANE)
        o_ref[:, :, idx] = (x_ref[:, :, idx].astype(jnp.float32) * s_b).astype(o_ref.dtype)
        return carry

    lax.fori_loop(0, n_slices, body, 0, unroll=min(8, n_slices))


def _squeeze_excite(m, w0t_ref, b0_ref, w1t_ref, b1_ref):
    """Pooled means (btile, C) -> sigmoid scales (btile, C), f32 MXU matmuls."""
    h = jnp.dot(m, w0t_ref[...], preferred_element_type=jnp.float32)
    h = jnp.maximum(h + b0_ref[...], 0.0)
    s = jnp.dot(h, w1t_ref[...], preferred_element_type=jnp.float32)
    return jax.nn.sigmoid(s + b1_ref[...])


# ---------------------------------------------------------------------------
# Kernels
# ---------------------------------------------------------------------------

def _se_fused_kernel(x_ref, w0t_ref, b0_ref, w1t_ref, b1_ref, o_ref, acc_ref,
                     *, inv_hw, n_slices):
    # x_ref / o_ref: (btile, C, HW_pad).  The slab is VMEM-resident, so the
    # scale apply re-reads it from VMEM (single HBM read of x).
    acc_ref[...] = jnp.zeros_like(acc_ref)
    _accumulate_slices(x_ref, acc_ref, n_slices)            # VPU adds
    m = jnp.sum(acc_ref[...], axis=2) * inv_hw              # one XLU lane-reduce
    s = _squeeze_excite(m, w0t_ref, b0_ref, w1t_ref, b1_ref)
    _apply_scale_slices(x_ref, o_ref, s, n_slices)


def _se_pool_kernel(x_ref, w0t_ref, b0_ref, w1t_ref, b1_ref, s_ref, acc_ref,
                    *, inv_hw, n_slices):
    # x_ref: (btile, C, hw_tile); s_ref: (btile, 1, C); acc_ref: (btile, C, 128) f32.
    hw = pl.program_id(1)

    @pl.when(hw == 0)
    def _():
        acc_ref[...] = jnp.zeros_like(acc_ref)

    _accumulate_slices(x_ref, acc_ref, n_slices)

    @pl.when(hw == pl.num_programs(1) - 1)
    def _():
        m = jnp.sum(acc_ref[...], axis=2) * inv_hw           # single lane-reduce
        s = _squeeze_excite(m, w0t_ref, b0_ref, w1t_ref, b1_ref)
        bt, C = s.shape
        s_ref[...] = s.reshape(bt, 1, C).astype(s_ref.dtype)


def _se_scale_kernel(x_ref, s_ref, o_ref, *, n_slices):
    # x_ref: (btile, C, hw_tile); s_ref: (btile, 1, C).
    bt, C, _ = x_ref.shape
    s = s_ref[...].reshape(bt, C)
    _apply_scale_slices(x_ref, o_ref, s, n_slices)


# ---------------------------------------------------------------------------
# Tile selection
# ---------------------------------------------------------------------------

def _pick_btile(B, C, per_buf_bytes):
    """Largest divisor of B giving >= 2 batch blocks (v7x megacore) whose
    128-lane f32 footprint (covers the accumulator) fits the per-buffer budget."""
    max_bt = B if B < 2 else B // 2
    for d in _divisors_desc(B):
        if d <= max_bt and d * C * LANE * 4 <= per_buf_bytes:
            return d
    return 1


def _choose_fused(B, C, HW, itemsize, vmem_limit):
    """Return (btile, hw_pad) for the fused single-read path, or None."""
    hw_pad = _round_up(HW, LANE)
    budget = int(vmem_limit * 0.9)
    max_bt = B if B < 2 else B // 2
    for d in _divisors_desc(B):
        if d > max_bt:
            continue
        slab = d * C * hw_pad * itemsize
        acc = d * C * LANE * 4
        need = 4 * slab + acc + (1 << 20)   # 2 in + 2 out double-buffers + acc + headroom
        if need <= budget:
            return d, hw_pad
    return None


def _choose_two_pass(B, C, HW, itemsize, vmem_limit, hw_tile_cap=None):
    """(btile, hw_tile, hw_pad) for the tiled two-pass path."""
    per_buf = max(vmem_limit // 5, 1 << 19)   # Pass 2 holds ~4 tile buffers + slack
    btile = _pick_btile(B, C, per_buf)
    hw_cap = _round_up(HW, LANE)
    hw_tile = (per_buf // max(1, btile * C * itemsize)) // LANE * LANE
    hw_tile = max(LANE, min(hw_tile, hw_cap))
    if hw_tile_cap is not None:
        hw_tile = max(LANE, min(hw_tile, hw_tile_cap))
    hw_pad = _round_up(HW, hw_tile)
    return btile, hw_tile, hw_pad


# ---------------------------------------------------------------------------
# Wrapper
# ---------------------------------------------------------------------------

def se_block(x, w0, b0, w1, b1, *, force_two_pass=False, hw_tile_cap=None):
    """SEBlock forward. x: (B, C, H, W); w0: (Cmid, C); b0: (Cmid,); w1: (C, Cmid); b1: (C,)."""
    B, C, H, W = x.shape
    Cmid = w0.shape[0]
    HW = H * W
    itemsize = jnp.dtype(x.dtype).itemsize
    inv_hw = float(1.0 / HW)  # true HW: zero padding does not perturb the mean

    # Pre-transpose the 1x1-conv weights (wrapper-side layout plumbing) so the
    # in-kernel contractions are plain row-major MXU matmuls.
    w0t = jnp.transpose(w0).astype(jnp.float32)      # (C, Cmid)
    w1t = jnp.transpose(w1).astype(jnp.float32)      # (Cmid, C)
    b0_2d = b0.reshape(1, Cmid).astype(jnp.float32)
    b1_2d = b1.reshape(1, C).astype(jnp.float32)

    vmem_limit = _vmem_limit_bytes()
    x_flat = x.reshape(B, C, HW)

    # TODO(synk): for tiny C (< sublane pack) the (C, hw) face under-fills
    # sublanes; collapsing (B, C) into one streaming axis would fix it but is
    # irrelevant for production SE blocks (C >= 64), so it is not done here.

    fused = None if force_two_pass else _choose_fused(B, C, HW, itemsize, vmem_limit)

    if fused is not None:
        # ---- Fused single-read path: grid over batch only ----
        btile, hw_pad = fused
        if hw_pad != HW:
            x_flat = jnp.pad(x_flat, ((0, 0), (0, 0), (0, hw_pad - HW)))
        n_slices = hw_pad // LANE
        grid = (B // btile,)

        out_flat = pl.pallas_call(
            functools.partial(_se_fused_kernel, inv_hw=inv_hw, n_slices=n_slices),
            out_shape=jax.ShapeDtypeStruct((B, C, hw_pad), x.dtype),
            grid_spec=pltpu.PrefetchScalarGridSpec(
                num_scalar_prefetch=0,
                grid=grid,
                in_specs=[
                    pl.BlockSpec((btile, C, hw_pad), lambda b: (b, 0, 0)),   # x slab
                    pl.BlockSpec((C, Cmid), lambda b: (0, 0)),               # w0^T
                    pl.BlockSpec((1, Cmid), lambda b: (0, 0)),               # b0
                    pl.BlockSpec((Cmid, C), lambda b: (0, 0)),               # w1^T
                    pl.BlockSpec((1, C), lambda b: (0, 0)),                  # b1
                ],
                out_specs=pl.BlockSpec((btile, C, hw_pad), lambda b: (b, 0, 0)),
                scratch_shapes=[pltpu.VMEM((btile, C, LANE), jnp.float32)],
            ),
            compiler_params=pltpu.CompilerParams(
                dimension_semantics=("parallel",),
                vmem_limit_bytes=vmem_limit,
            ),
        )(x_flat, w0t, b0_2d, w1t, b1_2d)
    else:
        # ---- Two-pass fallback: pool/squeeze-excite, then tiled scale apply ----
        btile, hw_tile, hw_pad = _choose_two_pass(B, C, HW, itemsize, vmem_limit,
                                                  hw_tile_cap)
        if hw_pad != HW:
            x_flat = jnp.pad(x_flat, ((0, 0), (0, 0), (0, hw_pad - HW)))
        n_slices = hw_tile // LANE
        grid = (B // btile, hw_pad // hw_tile)

        scales = pl.pallas_call(
            functools.partial(_se_pool_kernel, inv_hw=inv_hw, n_slices=n_slices),
            out_shape=jax.ShapeDtypeStruct((B, 1, C), jnp.float32),
            grid_spec=pltpu.PrefetchScalarGridSpec(
                num_scalar_prefetch=0,
                grid=grid,
                in_specs=[
                    pl.BlockSpec((btile, C, hw_tile), lambda b, hw: (b, 0, hw)),  # x
                    pl.BlockSpec((C, Cmid), lambda b, hw: (0, 0)),                # w0^T
                    pl.BlockSpec((1, Cmid), lambda b, hw: (0, 0)),                # b0
                    pl.BlockSpec((Cmid, C), lambda b, hw: (0, 0)),                # w1^T
                    pl.BlockSpec((1, C), lambda b, hw: (0, 0)),                   # b1
                ],
                out_specs=pl.BlockSpec((btile, 1, C), lambda b, hw: (b, 0, 0)),
                scratch_shapes=[pltpu.VMEM((btile, C, LANE), jnp.float32)],
            ),
            compiler_params=pltpu.CompilerParams(
                dimension_semantics=("parallel", "arbitrary"),
                vmem_limit_bytes=vmem_limit,
            ),
        )(x_flat, w0t, b0_2d, w1t, b1_2d)

        out_flat = pl.pallas_call(
            functools.partial(_se_scale_kernel, n_slices=n_slices),
            out_shape=jax.ShapeDtypeStruct((B, C, hw_pad), x.dtype),
            grid_spec=pltpu.PrefetchScalarGridSpec(
                num_scalar_prefetch=0,
                grid=grid,
                in_specs=[
                    pl.BlockSpec((btile, C, hw_tile), lambda b, hw: (b, 0, hw)),  # x
                    pl.BlockSpec((btile, 1, C), lambda b, hw: (b, 0, 0)),         # scale
                ],
                out_specs=pl.BlockSpec((btile, C, hw_tile), lambda b, hw: (b, 0, hw)),
            ),
            compiler_params=pltpu.CompilerParams(
                dimension_semantics=("parallel", "parallel"),
                vmem_limit_bytes=vmem_limit,
            ),
        )(x_flat, scales)

    if hw_pad != HW:
        out_flat = out_flat[:, :, :HW]
    return out_flat.reshape(B, C, H, W)


# ---------------------------------------------------------------------------
# Pure-JAX reference (matches the PyTorch SEBlock forward)
# ---------------------------------------------------------------------------

def se_block_ref(x, w0, b0, w1, b1):
    m = jnp.mean(x, axis=(2, 3), keepdims=True)                        # (B, C, 1, 1)
    h = jnp.einsum('bchw,mc->bmhw', m, w0) + b0[None, :, None, None]
    h = jnp.maximum(h, 0.0)
    s = jnp.einsum('bmhw,cm->bchw', h, w1) + b1[None, :, None, None]
    s = jax.nn.sigmoid(s)
    return x * s


if __name__ == "__main__":
    # Small shapes consistent with the module: channels_out=4, r=2 -> channels_mid=2
    B, C, H, W = 2, 4, 16, 16
    r = 2
    Cmid = C // r

    key = jax.random.PRNGKey(0)
    kx, kw0, kb0, kw1, kb1 = jax.random.split(key, 5)

    x = jax.random.normal(kx, (B, C, H, W), dtype=jnp.float32)
    # Conv2d 1x1 weights squeezed to 2D.
    w0 = 0.3 * jax.random.normal(kw0, (Cmid, C), dtype=jnp.float32)   # conv0.weight[:, :, 0, 0]
    b0 = 0.1 * jax.random.normal(kb0, (Cmid,), dtype=jnp.float32)     # conv0.bias
    w1 = 0.3 * jax.random.normal(kw1, (C, Cmid), dtype=jnp.float32)   # conv1.weight[:, :, 0, 0]
    b1 = 0.1 * jax.random.normal(kb1, (C,), dtype=jnp.float32)        # conv1.bias

    ref = se_block_ref(x, w0, b0, w1, b1)

    # Fused single-read path (default for shapes that fit VMEM).
    out = jax.block_until_ready(se_block(x, w0, b0, w1, b1))
    assert jnp.allclose(out, ref, atol=1e-5, rtol=1e-5), "fused path mismatch"

    # Tiled two-pass fallback (exercises the cross-step pool accumulator).
    out2 = jax.block_until_ready(
        se_block(x, w0, b0, w1, b1, force_two_pass=True, hw_tile_cap=128))
    assert jnp.allclose(out2, ref, atol=1e-5, rtol=1e-5), "two-pass path mismatch"

    # Ragged spatial size (H*W not a multiple of 128) exercises the padding path.
    x3 = jax.random.normal(kx, (B, C, 10, 10), dtype=jnp.float32)
    ref3 = se_block_ref(x3, w0, b0, w1, b1)
    out3 = jax.block_until_ready(se_block(x3, w0, b0, w1, b1))
    assert jnp.allclose(out3, ref3, atol=1e-5, rtol=1e-5), "ragged-HW path mismatch"

    print("KERNEL_OK")
</pallas_src>

<mosaic_0001>
module attributes {stable_mosaic.version = 11 : i64} {
  func.func @_se_fused_kernel(%arg0: i32, %arg1: memref<1x4x256xf32, #tpu.memory_space<vmem>>, %arg2: memref<4x2xf32, #tpu.memory_space<vmem>>, %arg3: memref<1x2xf32, #tpu.memory_space<vmem>>, %arg4: memref<2x4xf32, #tpu.memory_space<vmem>>, %arg5: memref<1x4xf32, #tpu.memory_space<vmem>>, %arg6: memref<1x4x256xf32, #tpu.memory_space<vmem>>, %arg7: memref<1x4x128xf32, #tpu.memory_space<vmem>>) attributes {dimension_semantics = [#tpu.dimension_semantics<parallel>], iteration_bounds = array<i64: 2>, scalar_prefetch = 0 : i64, scratch_operands = 1 : i64, tpu.core_type = #tpu.core_type<tc>, window_params = [{transform_indices = @transform_0, window_bounds = array<i64: 1, 4, 256>}, {pipeline_mode = #tpu.pipeline_mode<synchronous>, transform_indices = @transform_1, window_bounds = array<i64: 4, 2>}, {pipeline_mode = #tpu.pipeline_mode<synchronous>, transform_indices = @transform_2, window_bounds = array<i64: 1, 2>}, {pipeline_mode = #tpu.pipeline_mode<synchronous>, transform_indices = @transform_3, window_bounds = array<i64: 2, 4>}, {pipeline_mode = #tpu.pipeline_mode<synchronous>, transform_indices = @transform_4, window_bounds = array<i64: 1, 4>}, {transform_indices = @transform_5, window_bounds = array<i64: 1, 4, 256>}]} {
    %cst = arith.constant 0.000000e+00 : f32
    %0 = vector.broadcast %cst : f32 to vector<1x4x128xf32>
    %c0 = arith.constant 0 : index
    %c0_0 = arith.constant 0 : index
    %c0_1 = arith.constant 0 : index
    %1 = vector.load %arg7[%c0, %c0_0, %c0_1] : memref<1x4x128xf32, #tpu.memory_space<vmem>>, vector<1x4x128xf32>
    tpu.vector_store %arg7[%c0, %c0_0, %c0_1], %0 {strides = array<i32>} : memref<1x4x128xf32, #tpu.memory_space<vmem>>, vector<1x4x128xf32>,
    %c0_i32 = arith.constant 0 : i32
    %c128_i32 = arith.constant 128 : i32
    %2 = arith.muli %c0_i32, %c128_i32 : i32
    %3 = tpu.assume_multiple %2, 128 : i32
    %c0_2 = arith.constant 0 : index
    %c0_3 = arith.constant 0 : index
    %c0_4 = arith.constant 0 : index
    %4 = vector.load %arg7[%c0_2, %c0_3, %c0_4] : memref<1x4x128xf32, #tpu.memory_space<vmem>>, vector<1x4x128xf32>
    %c0_5 = arith.constant 0 : index
    %c0_6 = arith.constant 0 : index
    %5 = arith.index_cast %3 : i32 to index
    %6 = vector.load %arg1[%c0_5, %c0_6, %5] : memref<1x4x256xf32, #tpu.memory_space<vmem>>, vector<1x4x128xf32>
    %7 = arith.addf %4, %6 : vector<1x4x128xf32>
    %c0_7 = arith.constant 0 : index
    %c0_8 = arith.constant 0 : index
    %c0_9 = arith.constant 0 : index
    %8 = vector.load %arg7[%c0_7, %c0_8, %c0_9] : memref<1x4x128xf32, #tpu.memory_space<vmem>>, vector<1x4x128xf32>
    tpu.vector_store %arg7[%c0_7, %c0_8, %c0_9], %7 {strides = array<i32>} : memref<1x4x128xf32, #tpu.memory_space<vmem>>, vector<1x4x128xf32>,
    %c1_i32 = arith.constant 1 : i32
    %c128_i32_10 = arith.constant 128 : i32
    %9 = arith.muli %c1_i32, %c128_i32_10 : i32
    %10 = tpu.assume_multiple %9, 128 : i32
    %c0_11 = arith.constant 0 : index
    %c0_12 = arith.constant 0 : index
    %c0_13 = arith.constant 0 : index
    %11 = vector.load %arg7[%c0_11, %c0_12, %c0_13] : memref<1x4x128xf32, #tpu.memory_space<vmem>>, vector<1x4x128xf32>
    %c0_14 = arith.constant 0 : index
    %c0_15 = arith.constant 0 : index
    %12 = arith.index_cast %10 : i32 to index
    %13 = vector.load %arg1[%c0_14, %c0_15, %12] : memref<1x4x256xf32, #tpu.memory_space<vmem>>, vector<1x4x128xf32>
    %14 = arith.addf %11, %13 : vector<1x4x128xf32>
    %c0_16 = arith.constant 0 : index
    %c0_17 = arith.constant 0 : index
    %c0_18 = arith.constant 0 : index
    %15 = vector.load %arg7[%c0_16, %c0_17, %c0_18] : memref<1x4x128xf32, #tpu.memory_space<vmem>>, vector<1x4x128xf32>
    tpu.vector_store %arg7[%c0_16, %c0_17, %c0_18], %14 {strides = array<i32>} : memref<1x4x128xf32, #tpu.memory_space<vmem>>, vector<1x4x128xf32>,
    %c2_i32 = arith.constant 2 : i32
    %c0_19 = arith.constant 0 : index
    %c0_20 = arith.constant 0 : index
    %c0_21 = arith.constant 0 : index
    %16 = vector.load %arg7[%c0_19, %c0_20, %c0_21] : memref<1x4x128xf32, #tpu.memory_space<vmem>>, vector<1x4x128xf32>
    %cst_22 = arith.constant dense<0.000000e+00> : vector<1x4xf32>
    %17 = vector.multi_reduction <add>, %16, %cst_22 [2] : vector<1x4x128xf32> to vector<1x4xf32>
    %cst_23 = arith.constant 3.906250e-03 : f32
    %18 = vector.broadcast %cst_23 : f32 to vector<1x4xf32>
    %19 = arith.mulf %17, %18 : vector<1x4xf32>
    %c0_24 = arith.constant 0 : index
    %c0_25 = arith.constant 0 : index
    %20 = vector.load %arg2[%c0_24, %c0_25] : memref<4x2xf32, #tpu.memory_space<vmem>>, vector<4x2xf32>
    %cst_26 = arith.constant dense<0.000000e+00> : vector<1x2xf32>
    %21 = tpu.matmul %19, %20, %cst_26 {dimension_numbers = #tpu.dot_dimension_numbers<[1], [0], [0], [1], [0, 0, 1, 1], [], []>} : vector<1x4xf32>, vector<4x2xf32>, vector<1x2xf32> -> vector<1x2xf32>
    %c0_27 = arith.constant 0 : index
    %c0_28 = arith.constant 0 : index
    %22 = vector.load %arg3[%c0_27, %c0_28] : memref<1x2xf32, #tpu.memory_space<vmem>>, vector<1x2xf32>
    %23 = arith.addf %21, %22 : vector<1x2xf32>
    %cst_29 = arith.constant 0.000000e+00 : f32
    %24 = vector.broadcast %cst_29 : f32 to vector<1x2xf32>
    %25 = arith.maximumf %23, %24 : vector<1x2xf32>
    %c0_30 = arith.constant 0 : index
    %c0_31 = arith.constant 0 : index
    %26 = vector.load %arg4[%c0_30, %c0_31] : memref<2x4xf32, #tpu.memory_space<vmem>>, vector<2x4xf32>
    %cst_32 = arith.constant dense<0.000000e+00> : vector<1x4xf32>
    %27 = tpu.matmul %25, %26, %cst_32 {dimension_numbers = #tpu.dot_dimension_numbers<[1], [0], [0], [1], [0, 0, 1, 1], [], []>} : vector<1x2xf32>, vector<2x4xf32>, vector<1x4xf32> -> vector<1x4xf32>
    %c0_33 = arith.constant 0 : index
    %c0_34 = arith.constant 0 : index
    %28 = vector.load %arg5[%c0_33, %c0_34] : memref<1x4xf32, #tpu.memory_space<vmem>>, vector<1x4xf32>
    %29 = arith.addf %27, %28 : vector<1x4xf32>
    %30 = arith.negf %29 : vector<1x4xf32>
    %31 = math.exp %30 : vector<1x4xf32>
    %cst_35 = arith.constant 1.000000e+00 : f32
    %32 = vector.broadcast %cst_35 : f32 to vector<1x4xf32>
    %33 = arith.addf %32, %31 : vector<1x4xf32>
    %34 = arith.divf %32, %33 : vector<1x4xf32>
    %35 = vector.shape_cast %34 : vector<1x4xf32> to vector<1x4x1xf32>
    %36 = vector.shape_cast %35 : vector<1x4x1xf32> to vector<1x4x1xf32>
    %37 = vector.broadcast %36 : vector<1x4x1xf32> to vector<1x4x128xf32>
    %c0_i32_36 = arith.constant 0 : i32
    %c128_i32_37 = arith.constant 128 : i32
    %38 = arith.muli %c0_i32_36, %c128_i32_37 : i32
    %39 = tpu.assume_multiple %38, 128 : i32
    %c0_38 = arith.constant 0 : index
    %c0_39 = arith.constant 0 : index
    %40 = arith.index_cast %39 : i32 to index
    %41 = vector.load %arg1[%c0_38, %c0_39, %40] : memref<1x4x256xf32, #tpu.memory_space<vmem>>, vector<1x4x128xf32>
    %42 = arith.mulf %41, %37 : vector<1x4x128xf32>
    %c0_40 = arith.constant 0 : index
    %c0_41 = arith.constant 0 : index
    %43 = arith.index_cast %39 : i32 to index
    %44 = vector.load %arg6[%c0_40, %c0_41, %43] : memref<1x4x256xf32, #tpu.memory_space<vmem>>, vector<1x4x128xf32>
    tpu.vector_store %arg6[%c0_40, %c0_41, %43], %42 {strides = array<i32>} : memref<1x4x256xf32, #tpu.memory_space<vmem>>, vector<1x4x128xf32>,
    %c1_i32_42 = arith.constant 1 : i32
    %c128_i32_43 = arith.constant 128 : i32
    %45 = arith.muli %c1_i32_42, %c128_i32_43 : i32
    %46 = tpu.assume_multiple %45, 128 : i32
    %c0_44 = arith.constant 0 : index
    %c0_45 = arith.constant 0 : index
    %47 = arith.index_cast %46 : i32 to index
    %48 = vector.load %arg1[%c0_44, %c0_45, %47] : memref<1x4x256xf32, #tpu.memory_space<vmem>>, vector<1x4x128xf32>
    %49 = arith.mulf %48, %37 : vector<1x4x128xf32>
    %c0_46 = arith.constant 0 : index
    %c0_47 = arith.constant 0 : index
    %50 = arith.index_cast %46 : i32 to index
    %51 = vector.load %arg6[%c0_46, %c0_47, %50] : memref<1x4x256xf32, #tpu.memory_space<vmem>>, vector<1x4x128xf32>
    tpu.vector_store %arg6[%c0_46, %c0_47, %50], %49 {strides = array<i32>} : memref<1x4x256xf32, #tpu.memory_space<vmem>>, vector<1x4x128xf32>,
    %c2_i32_48 = arith.constant 2 : i32
    return
  }
  func.func @transform_0(%arg0: i32) -> (i32, i32, i32) {
    %c0_i32 = arith.constant 0 : i32
    %c0_i32_0 = arith.constant 0 : i32
    %c0_i32_1 = arith.constant 0 : i32
    return %arg0, %c0_i32, %c0_i32_0 : i32, i32, i32
  }
  func.func @transform_1(%arg0: i32) -> (i32, i32) {
    %c0_i32 = arith.constant 0 : i32
    %c0_i32_0 = arith.constant 0 : i32
    %c0_i32_1 = arith.constant 0 : i32
    return %c0_i32, %c0_i32_0 : i32, i32
  }
  func.func @transform_2(%arg0: i32) -> (i32, i32) {
    %c0_i32 = arith.constant 0 : i32
    %c0_i32_0 = arith.constant 0 : i32
    %c0_i32_1 = arith.constant 0 : i32
    return %c0_i32, %c0_i32_0 : i32, i32
  }
  func.func @transform_3(%arg0: i32) -> (i32, i32) {
    %c0_i32 = arith.constant 0 : i32
    %c0_i32_0 = arith.constant 0 : i32
    %c0_i32_1 = arith.constant 0 : i32
    return %c0_i32, %c0_i32_0 : i32, i32
  }
  func.func @transform_4(%arg0: i32) -> (i32, i32) {
    %c0_i32 = arith.constant 0 : i32
    %c0_i32_0 = arith.constant 0 : i32
    %c0_i32_1 = arith.constant 0 : i32
    return %c0_i32, %c0_i32_0 : i32, i32
  }
  func.func @transform_5(%arg0: i32) -> (i32, i32, i32) {
    %c0_i32 = arith.constant 0 : i32
    %c0_i32_0 = arith.constant 0 : i32
    %c0_i32_1 = arith.constant 0 : i32
    return %arg0, %c0_i32, %c0_i32_0 : i32, i32, i32
  }
}

</mosaic_0001>

<llo_original>
// kernel: tpu_custom_call.1
$region0: #{tpu_custom_call.1}
  #allocation0 [shape = 'u32[]', space=smem, size = 0x4, offset = 0x4, fixed_abs, tag = 'smem constant byte address 0x4 - core index']
  #allocation1 [shape = 'u32[144,128]{1,0:T(1,128)}', space=vmem, size = 0x12000, scoped, tag = 'internal scratch']
  #allocation2 [shape = 'f32[1,4,128]{2,1,0:T(4,128)}', space=vmem, size = 0x800, scoped, tag = 'scratch operand']
  %s0 = inlined_call_operand.hbm [shape: f32[2,4,256], index: 0, kind: input, shape index: {}]
  %s1 = inlined_call_operand.vmem [shape: f32[4,2], index: 1, kind: input, shape index: {}]
  %s2 = inlined_call_operand.vmem [shape: f32[1,2], index: 2, kind: input, shape index: {}]
  %s3 = inlined_call_operand.vmem [shape: f32[2,4], index: 3, kind: input, shape index: {}]
  %s4 = inlined_call_operand.vmem [shape: f32[1,4], index: 4, kind: input, shape index: {}]
  %s5 = inlined_call_operand.hbm [shape: f32[2,4,256], index: 5, kind: output, shape index: {}]
  %s6 = sld [smem:[#allocation0]]
  $region57: #{tpu_custom_call.1} parent=0
    _
  %s8 = ssub.s32 1, %s6
  %s9 = scalar_select 0, %s8, %s6
  $region1: #{tpu_custom_call.1} parent=0
    #allocation3 [shape = 'u8[8192]{0}', space=vmem, size = 0x2000, scoped, tag = 'input window, operand 0']
    #allocation4 [shape = 's32[2]{0}', space=sflag, size = 0x8, scoped, tag = 'scoped memory for tpu_custom_call.1']
    #allocation5 [shape = 's32[2]{0}', space=sflag, size = 0x8, scoped, tag = 'scoped memory for tpu_custom_call.1']
    #allocation6 [shape = 'u8[8192]{0}', space=vmem, size = 0x2000, scoped, tag = 'output window, operand 0']
    %10 = vsyncpa [#allocation4], 0
    %s11 = scalar_lea.sflag [#allocation4], 1
    %12 = vsyncpa %s11, 0
    %13 = vsyncpa [#allocation5], 0
    %s14 = scalar_lea.sflag [#allocation5], 1
    %15 = vsyncpa %s14, 0
    loop: start=0, step=1, limit=4
    $region2: #{tpu_custom_call.1} parent=1 // loop_pre_header
      _
    $region3: #{tpu_custom_call.1} parent=1 // loop_header
      %s17 = sphi 0, %s21
      %p18 = scmp.ge.s32.totalorder %s17, 4
      %s27 = sphi 0, %s29
      %s30 = sphi 0, %s27
      %s31 = sphi 0, %s30
      %s47 = sphi 0, %s31
      %s51 = sphi 0, %s51
      %s53 = sphi 0, %s51
      %s54 = sphi 0, %s53
      %s68 = sphi 0, %s54
      %s72 = sphi 0, %s72
      %s74 = sphi 0, %s72
      %s75 = sphi 0, %s74
      %s89 = sphi 0, %s75
      %s93 = sphi 0, %s93
      %s95 = sphi 0, %s93
      %s96 = sphi 0, %s95
      %s110 = sphi 0, %s96
      %s114 = sphi 0, %s114
      %s116 = sphi 0, %s114
      %s117 = sphi 0, %s116
      %s131 = sphi 0, %s117
      %s137 = sphi 0, %s139
      %s140 = sphi 0, %s137
      %s141 = sphi 0, %s140
      %s157 = sphi 0, %s141
    $region4: #{tpu_custom_call.1} parent=1 // loop_header_branch
      %20 = sbr.rel (%p18) target = $region8
    $region5: #{tpu_custom_call.1} parent=1 // loop_body
      %s22 = ssub.s32 %s17, 1
      %s23 = ssub.s32 %s17, 2
      %s24 = sadd.s32 %s17, 1
      %s25 = ssub.s32 %s17, %s24
      %p26 = scmp.eq.s32.totalorder %s25, 0
      %s28 = sadd.s32 %s27, 1
      %s29 = scalar_select %p26, %s27, %s28
      %p32 = pneg %p26
      %p33 = scmp.eq.s32.totalorder %s17, 1
      %p34 = por %p32, %p33
      %p35 = scmp.ne.s32.totalorder %s27, %s30
      %p36 = scmp.eq.s32.totalorder %s17, 0
      %p37 = por %p35, %p36
      %p38 = scmp.ne.s32.totalorder %s27, %s30
      %p39 = scmp.eq.s32.totalorder %s22, 1
      %p40 = por %p38, %p39
      %p41 = scmp.ne.s32.totalorder %s30, %s31
      %p42 = scmp.eq.s32.totalorder %s22, 0
      %p43 = por %p41, %p42
      %p44 = scmp.ne.s32.totalorder %s30, %s31
      %p45 = scmp.eq.s32.totalorder %s23, 1
      %p46 = por %p44, %p45
      %p48 = scmp.ne.s32.totalorder %s31, %s47
      %p49 = scmp.eq.s32.totalorder %s23, 0
      %p50 = por %p48, %p49
      %s52 = sadd.s32 %s51, 1
      %p55 = scmp.eq.s32.totalorder %s17, 1
      %p56 = scmp.ne.s32.totalorder %s51, %s53
      %p57 = scmp.eq.s32.totalorder %s17, 0
      %p58 = por %p56, %p57
      %p59 = scmp.ne.s32.totalorder %s51, %s53
      %p60 = scmp.eq.s32.totalorder %s22, 1
      %p61 = por %p59, %p60
      %p62 = scmp.ne.s32.totalorder %s53, %s54
      %p63 = scmp.eq.s32.totalorder %s22, 0
      %p64 = por %p62, %p63
      %p65 = scmp.ne.s32.totalorder %s53, %s54
      %p66 = scmp.eq.s32.totalorder %s23, 1
      %p67 = por %p65, %p66
      %p69 = scmp.ne.s32.totalorder %s54, %s68
      %p70 = scmp.eq.s32.totalorder %s23, 0
      %p71 = por %p69, %p70
      %s73 = sadd.s32 %s72, 1
      %p76 = scmp.eq.s32.totalorder %s17, 1
      %p77 = scmp.ne.s32.totalorder %s72, %s74
      %p78 = scmp.eq.s32.totalorder %s17, 0
      %p79 = por %p77, %p78
      %p80 = scmp.ne.s32.totalorder %s72, %s74
      %p81 = scmp.eq.s32.totalorder %s22, 1
      %p82 = por %p80, %p81
      %p83 = scmp.ne.s32.totalorder %s74, %s75
      %p84 = scmp.eq.s32.totalorder %s22, 0
      %p85 = por %p83, %p84
      %p86 = scmp.ne.s32.totalorder %s74, %s75
      %p87 = scmp.eq.s32.totalorder %s23, 1
      %p88 = por %p86, %p87
      %p90 = scmp.ne.s32.totalorder %s75, %s89
      %p91 = scmp.eq.s32.totalorder %s23, 0
      %p92 = por %p90, %p91
      %s94 = sadd.s32 %s93, 1
      %p97 = scmp.eq.s32.totalorder %s17, 1
      %p98 = scmp.ne.s32.totalorder %s93, %s95
      %p99 = scmp.eq.s32.totalorder %s17, 0
      %p100 = por %p98, %p99
      %p101 = scmp.ne.s32.totalorder %s93, %s95
      %p102 = scmp.eq.s32.totalorder %s22, 1
      %p103 = por %p101, %p102
      %p104 = scmp.ne.s32.totalorder %s95, %s96
      %p105 = scmp.eq.s32.totalorder %s22, 0
      %p106 = por %p104, %p105
      %p107 = scmp.ne.s32.totalorder %s95, %s96
      %p108 = scmp.eq.s32.totalorder %s23, 1
      %p109 = por %p107, %p108
      %p111 = scmp.ne.s32.totalorder %s96, %s110
      %p112 = scmp.eq.s32.totalorder %s23, 0
      %p113 = por %p111, %p112
      %s115 = sadd.s32 %s114, 1
      %p118 = scmp.eq.s32.totalorder %s17, 1
      %p119 = scmp.ne.s32.totalorder %s114, %s116
      %p120 = scmp.eq.s32.totalorder %s17, 0
      %p121 = por %p119, %p120
      %p122 = scmp.ne.s32.totalorder %s114, %s116
      %p123 = scmp.eq.s32.totalorder %s22, 1
      %p124 = por %p122, %p123
      %p125 = scmp.ne.s32.totalorder %s116, %s117
      %p126 = scmp.eq.s32.totalorder %s22, 0
      %p127 = por %p125, %p126
      %p128 = scmp.ne.s32.totalorder %s116, %s117
      %p129 = scmp.eq.s32.totalorder %s23, 1
      %p130 = por %p128, %p129
      %p132 = scmp.ne.s32.totalorder %s117, %s131
      %p133 = scmp.eq.s32.totalorder %s23, 0
      %p134 = por %p132, %p133
      %s135 = ssub.s32 %s17, %s24
      %p136 = scmp.eq.s32.totalorder %s135, 0
      %s138 = sadd.s32 %s137, 1
      %s139 = scalar_select %p136, %s137, %s138
      %p142 = pneg %p136
      %p143 = scmp.eq.s32.totalorder %s17, 1
      %p144 = por %p142, %p143
      %p145 = scmp.ne.s32.totalorder %s137, %s140
      %p146 = scmp.eq.s32.totalorder %s17, 0
      %p147 = por %p145, %p146
      %p148 = scmp.ne.s32.totalorder %s137, %s140
      %p149 = scmp.eq.s32.totalorder %s22, 1
      %p150 = por %p148, %p149
      %p151 = scmp.ne.s32.totalorder %s140, %s141
      %p152 = scmp.eq.s32.totalorder %s22, 0
      %p153 = por %p151, %p152
      %p154 = scmp.ne.s32.totalorder %s140, %s141
      %p155 = scmp.eq.s32.totalorder %s23, 1
      %p156 = por %p154, %p155
      %p158 = scmp.ne.s32.totalorder %s141, %s157
      %p159 = scmp.eq.s32.totalorder %s23, 0
      %p160 = por %p158, %p159
      %p161 = scmp.le.s32.totalorder 1, %s17
      %p162 = scmp.lt.s32.totalorder %s17, 3
      %p163 = pnand %p161, %p162
      %p164 = pneg %p163
      // Predicated region
      $region9: #{tpu_custom_call.1} parent=5 // pred_check
        _
      $region10: #{tpu_custom_call.1} parent=5 // pred_check_branch
        %166 = sbr.rel (%p163) target = $region12
      $region11: #{tpu_custom_call.1} parent=5 // pred_region
        %s167 = ssub.s32 %s17, 1
        // Predicated region
        $region13: #{tpu_custom_call.1} parent=11 // pred_check
          %p168 = pneg %p64
        $region14: #{tpu_custom_call.1} parent=11 // pred_check_branch
          %170 = sbr.rel (%p168) target = $region16
        $region15: #{tpu_custom_call.1} parent=11 // pred_region
          _
        $region16: #{tpu_custom_call.1} parent=11 // pred_fallthru
          _
        // Predicated region
        $region17: #{tpu_custom_call.1} parent=11 // pred_check
          %p171 = pneg %p85
        $region18: #{tpu_custom_call.1} parent=11 // pred_check_branch
          %173 = sbr.rel (%p171) target = $region20
        $region19: #{tpu_custom_call.1} parent=11 // pred_region
          _
        $region20: #{tpu_custom_call.1} parent=11 // pred_fallthru
          _
        // Predicated region
        $region21: #{tpu_custom_call.1} parent=11 // pred_check
          %p174 = pneg %p106
        $region22: #{tpu_custom_call.1} parent=11 // pred_check_branch
          %176 = sbr.rel (%p174) target = $region24
        $region23: #{tpu_custom_call.1} parent=11 // pred_region
          _
        $region24: #{tpu_custom_call.1} parent=11 // pred_fallthru
          _
        // Predicated region
        $region25: #{tpu_custom_call.1} parent=11 // pred_check
          %p177 = pneg %p127
        $region26: #{tpu_custom_call.1} parent=11 // pred_check_branch
          %179 = sbr.rel (%p177) target = $region28
        $region27: #{tpu_custom_call.1} parent=11 // pred_region
          _
        $region28: #{tpu_custom_call.1} parent=11 // pred_fallthru
          _
      $region12: #{tpu_custom_call.1} parent=5 // pred_fallthru
        _
      %p180 = scmp.lt.s32.totalorder %s17, 2
      // Predicated region
      $region29: #{tpu_custom_call.1} parent=5 // pred_check
        %p181 = pneg %p180
      $region30: #{tpu_custom_call.1} parent=5 // pred_check_branch
        %183 = sbr.rel (%p181) target = $region32
      $region31: #{tpu_custom_call.1} parent=5 // pred_region
        // Predicated region
        $region33: #{tpu_custom_call.1} parent=31 // pred_check
          %p184 = pneg %p37
        $region34: #{tpu_custom_call.1} parent=31 // pred_check_branch
          %186 = sbr.rel (%p184) target = $region36
        $region35: #{tpu_custom_call.1} parent=31 // pred_region
          %s187 = sand.u32 %s27, 1
          %s188 = scalar_lea.sflag [#allocation4], %s187
          %s189 = sand.u32 %s27, 1
          %s190 = smul.addr %s189, 8
          %s191 = scalar_lea.vmem [#allocation3], %s190
          %s193 = ssub.s32 128, 128
          %194 = vsyncadd %s188, %s193
          %s195 = smul.addr %s17, 2
          %s196 = smul.addr %s195, 64
          %s197 = scalar_lea.hbm %s0, %s196
          %s199 = sshll.u32 %s191, 4
          %s200 = int_to_ptr.vmem [resolvable:$true] %s199
          %202 = dma.hbm_to_vmem [thread:$0]  %s197, 128, %s200, %s188
        $region36: #{tpu_custom_call.1} parent=31 // pred_fallthru
          _
      $region32: #{tpu_custom_call.1} parent=5 // pred_fallthru
        _
      %p203 = scmp.le.s32.totalorder 1, %s17
      %p204 = scmp.lt.s32.totalorder %s17, 3
      %p205 = pnand %p203, %p204
      %p206 = pneg %p205
      // Predicated region
      $region37: #{tpu_custom_call.1} parent=5 // pred_check
        _
      $region38: #{tpu_custom_call.1} parent=5 // pred_check_branch
        %208 = sbr.rel (%p205) target = $region40
      $region39: #{tpu_custom_call.1} parent=5 // pred_region
        %s209 = ssub.s32 %s17, 1
        %s210 = sand.u32 %s30, 1
        %s211 = scalar_lea.sflag [#allocation4], %s210
        %s212 = sand.u32 %s30, 1
        %s213 = smul.addr %s212, 8
        %s214 = scalar_lea.vmem [#allocation3], %s213
        // Predicated region
        $region41: #{tpu_custom_call.1} parent=39 // pred_check
          %p215 = pneg %p43
        $region42: #{tpu_custom_call.1} parent=39 // pred_check_branch
          %217 = sbr.rel (%p215) target = $region44
        $region43: #{tpu_custom_call.1} parent=39 // pred_region
          %218 = dma.done %s211, 128
        $region44: #{tpu_custom_call.1} parent=39 // pred_fallthru
          _
        %s219 = sand.u32 %s30, 1
        %s220 = scalar_lea.sflag [#allocation4], %s219
        %s221 = sand.u32 %s30, 1
        %s222 = smul.addr %s221, 8
        %s223 = scalar_lea.vmem [#allocation3], %s222
        %p224 = pneg %p43
        %p225 = pneg %p40
        %p226 = pneg %p64
        %p227 = pneg %p61
        %p228 = pneg %p85
        %p229 = pneg %p82
        %p230 = pneg %p106
        %p231 = pneg %p103
        %p232 = pneg %p127
        %p233 = pneg %p124
        %p234 = pneg %p153
        %p235 = pneg %p150
        %s236 = sand.u32 %s140, 1
        %s237 = scalar_lea.sflag [#allocation5], %s236
        %s238 = sand.u32 %s140, 1
        %s239 = smul.addr %s238, 8
        %s240 = scalar_lea.vmem [#allocation6], %s239
        %241 = vst [vmem:[#allocation2] sm:$0xf] 0.0
        %v242 = vld [vmem:[#allocation2] sm:$0xf]
        %v243 = vld [vmem:[%s214] sm:$0xf]
        %v244 = vadd.f32 %v242, %v243
        %245 = vst [vmem:[#allocation2] sm:$0xf] %v244
        %v246 = vld [vmem:[#allocation2] sm:$0xf]
        %s247 = scalar_lea.vmem %s214, 4 [#allocation3]
        %v248 = vld [vmem:[%s247] sm:$0xf]
        %v249 = vadd.f32 %v246, %v248
        %250 = vst [vmem:[#allocation2] sm:$0xf] %v249
        %v251 = vld [vmem:[#allocation2] sm:$0xf]
        %vm252 = vcmask 1043456
        %v253 = vsel %vm252, %v251, 0.0
        %254 = vadd.xlane.f32.xlu0 %v253
        %v255 = vpop.xlane.xlu0 %254
        %v256 = vmul.f32 %v255, 0.00390625
        %v257 = vld [vmem:[%s1] sm:$0xf]
        %v258 = vld [vmem:[%s2] sm:$0x1]
        %v260 = vlaneseq
        %v261 = vand.u32 %v260, 127
        %v262 = vlaneseq
        %v263 = vshrl.u32 %v262, 7
        %v264 = vsub.s32 %v261, %v263
        %v265 = vrot.slane %v256, %v264
        %vm266 = vcmask 31744
        %v267 = vsel %vm266, %v265, 0
        %v270 = vsel %vm252, %v257, 0
        %272 = vmatprep.subr.mxu0 0.0
        %273 = vmatpush1.msra.mxu0 0.0
        %274 = vmatprep.subr.mxu0 0.0
        %275 = vmatpush1.msra.mxu0 0.0
        %276 = vmatprep.subr.mxu0 0.0
        %277 = vmatpush1.msra.mxu0 0.0
        %278 = vmatprep.subr.mxu0 0.0
        %279 = vmatpush1.msra.mxu0 0.0
        %280 = vmatprep.subr.mxu0 0.0
        %281 = vmatpush1.msra.mxu0 0.0
        %282 = vmatprep.subr.mxu0 0.0
        %283 = vmatpush1.msra.mxu0 0.0
        %284 = vmatprep.subr.mxu0 0.0
        %285 = vmatpush1.msra.mxu0 0.0
        %286 = vmatprep.subr.mxu0 0.0
        %287 = vmatpush1.msra.mxu0 0.0
        %288 = vmatprep.subr.mxu0 0.0
        %289 = vmatpush1.msra.mxu0 0.0
        %290 = vmatprep.subr.mxu0 0.0
        %291 = vmatpush1.msra.mxu0 0.0
        %292 = vmatprep.subr.mxu0 0.0
        %293 = vmatpush1.msra.mxu0 0.0
        %294 = vmatprep.subr.mxu0 0.0
        %295 = vmatpush1.msra.mxu0 0.0
        %296 = vmatprep.subr.mxu0 0.0
        %297 = vmatpush1.msra.mxu0 0.0
        %298 = vmatprep.subr.mxu0 0.0
        %299 = vmatpush1.msra.mxu0 0.0
        %300 = vmatprep.subr.mxu0 0.0
        %301 = vmatpush1.msra.mxu0 0.0
        %302 = vmatprep.subr.mxu0 0.0
        %303 = vmatpush1.msra.mxu0 %v270
        %304 = vmatprep.subr.mxu0 0.0
        %305 = vmatpush2.msra.mxu0 0.0
        %306 = vmatprep.subr.mxu0 0.0
        %307 = vmatpush2.msra.mxu0 0.0
        %308 = vmatprep.subr.mxu0 0.0
        %309 = vmatpush2.msra.mxu0 0.0
        %310 = vmatprep.subr.mxu0 0.0
        %311 = vmatpush2.msra.mxu0 0.0
        %312 = vmatprep.subr.mxu0 0.0
        %313 = vmatpush2.msra.mxu0 0.0
        %314 = vmatprep.subr.mxu0 0.0
        %315 = vmatpush2.msra.mxu0 0.0
        %316 = vmatprep.subr.mxu0 0.0
        %317 = vmatpush2.msra.mxu0 0.0
        %318 = vmatprep.subr.mxu0 0.0
        %319 = vmatpush2.msra.mxu0 0.0
        %320 = vmatprep.subr.mxu0 0.0
        %321 = vmatpush2.msra.mxu0 0.0
        %322 = vmatprep.subr.mxu0 0.0
        %323 = vmatpush2.msra.mxu0 0.0
        %324 = vmatprep.subr.mxu0 0.0
        %325 = vmatpush2.msra.mxu0 0.0
        %326 = vmatprep.subr.mxu0 0.0
        %327 = vmatpush2.msra.mxu0 0.0
        %328 = vmatprep.subr.mxu0 0.0
        %329 = vmatpush2.msra.mxu0 0.0
        %330 = vmatprep.subr.mxu0 0.0
        %331 = vmatpush2.msra.mxu0 0.0
        %332 = vmatprep.subr.mxu0 0.0
        %333 = vmatpush2.msra.mxu0 0.0
        %334 = vmatprep.subr.mxu0 0.0
        %335 = vmatpush2.msra.mxu0 0.0
        %336 = vmatprep.mubr.f32.mxu0 0.0
        %337 = vmatmul.mubr.f32.gmra.mxu0 %v267
        %v338 = vpop.f32.mrf.mxu0
        %v339 = vadd.f32 %v258, %v338
        %v340 = vpop.f32.mrf.mxu0
        %341 = vdwg.mxu0
        %v342 = vmax.f32 %v339, 0.0
        %v343 = vld [vmem:[%s3] sm:$0x3]
        %v344 = vld [vmem:[%s4] sm:$0x1]
        %vm345 = vcmask 15360
        %v347 = vsel %vm345, %v342, 0
        %vm349 = vcmask 1041408
        %v351 = vsel %vm349, %v343, 0
        %353 = vmatprep.subr.mxu0 0.0
        %354 = vmatpush1.msra.mxu0 0.0
        %355 = vmatprep.subr.mxu0 0.0
        %356 = vmatpush1.msra.mxu0 0.0
        %357 = vmatprep.subr.mxu0 0.0
        %358 = vmatpush1.msra.mxu0 0.0
        %359 = vmatprep.subr.mxu0 0.0
        %360 = vmatpush1.msra.mxu0 0.0
        %361 = vmatprep.subr.mxu0 0.0
        %362 = vmatpush1.msra.mxu0 0.0
        %363 = vmatprep.subr.mxu0 0.0
        %364 = vmatpush1.msra.mxu0 0.0
        %365 = vmatprep.subr.mxu0 0.0
        %366 = vmatpush1.msra.mxu0 0.0
        %367 = vmatprep.subr.mxu0 0.0
        %368 = vmatpush1.msra.mxu0 0.0
        %369 = vmatprep.subr.mxu0 0.0
        %370 = vmatpush1.msra.mxu0 0.0
        %371 = vmatprep.subr.mxu0 0.0
        %372 = vmatpush1.msra.mxu0 0.0
        %373 = vmatprep.subr.mxu0 0.0
        %374 = vmatpush1.msra.mxu0 0.0
        %375 = vmatprep.subr.mxu0 0.0
        %376 = vmatpush1.msra.mxu0 0.0
        %377 = vmatprep.subr.mxu0 0.0
        %378 = vmatpush1.msra.mxu0 0.0
        %379 = vmatprep.subr.mxu0 0.0
        %380 = vmatpush1.msra.mxu0 0.0
        %381 = vmatprep.subr.mxu0 0.0
        %382 = vmatpush1.msra.mxu0 0.0
        %383 = vmatprep.subr.mxu0 0.0
        %384 = vmatpush1.msra.mxu0 %v351
        %385 = vmatprep.subr.mxu0 0.0
        %386 = vmatpush2.msra.mxu0 0.0
        %387 = vmatprep.subr.mxu0 0.0
        %388 = vmatpush2.msra.mxu0 0.0
        %389 = vmatprep.subr.mxu0 0.0
        %390 = vmatpush2.msra.mxu0 0.0
        %391 = vmatprep.subr.mxu0 0.0
        %392 = vmatpush2.msra.mxu0 0.0
        %393 = vmatprep.subr.mxu0 0.0
        %394 = vmatpush2.msra.mxu0 0.0
        %395 = vmatprep.subr.mxu0 0.0
        %396 = vmatpush2.msra.mxu0 0.0
        %397 = vmatprep.subr.mxu0 0.0
        %398 = vmatpush2.msra.mxu0 0.0
        %399 = vmatprep.subr.mxu0 0.0
        %400 = vmatpush2.msra.mxu0 0.0
        %401 = vmatprep.subr.mxu0 0.0
        %402 = vmatpush2.msra.mxu0 0.0
        %403 = vmatprep.subr.mxu0 0.0
        %404 = vmatpush2.msra.mxu0 0.0
        %405 = vmatprep.subr.mxu0 0.0
        %406 = vmatpush2.msra.mxu0 0.0
        %407 = vmatprep.subr.mxu0 0.0
        %408 = vmatpush2.msra.mxu0 0.0
        %409 = vmatprep.subr.mxu0 0.0
        %410 = vmatpush2.msra.mxu0 0.0
        %411 = vmatprep.subr.mxu0 0.0
        %412 = vmatpush2.msra.mxu0 0.0
        %413 = vmatprep.subr.mxu0 0.0
        %414 = vmatpush2.msra.mxu0 0.0
        %415 = vmatprep.subr.mxu0 0.0
        %416 = vmatpush2.msra.mxu0 0.0
        %417 = vmatprep.mubr.f32.mxu0 0.0
        %418 = vmatmul.mubr.f32.gmra.mxu0 %v347
        %v419 = vpop.f32.mrf.mxu0
        %v420 = vadd.f32 %v344, %v419
        %v421 = vpop.f32.mrf.mxu0
        %422 = vdwg.mxu0
        %v423 = vxor.u32 %v420, 2147483648
        %v424 = vmul.f32 %v423, 1.442695
        %v425 = vpow.pop %v424
        %v426 = vadd.f32 %v425, 1.0
        %v427 = vrcp.pop %v426
        %v428 = vmul.f32 1.0, %v427
        %v429 = vlaneseq
        %v430 = vshrl.u32 %v429, 7
        %v431 = vsub.s32 0, %v430
        %v432 = vrot.slane %v428, %v431
        %434 = vbcast.lane.b32.xlu0 %v432, 256
        %v435 = vpop.permute.xlu0 %434
        %v436 = vld [vmem:[%s214] sm:$0xf]
        %v437 = vmul.f32 %v436, %v435
        %438 = vst [vmem:[%s240] sm:$0xf] %v437
        %v439 = vld [vmem:[%s247] sm:$0xf]
        %v440 = vmul.f32 %v439, %v435
        %s441 = scalar_lea.vmem %s240, 4 [#allocation6]
        %442 = vst [vmem:[%s441] sm:$0xf] %v440
        %s443 = sand.u32 %s140, 1
        %s444 = scalar_lea.sflag [#allocation5], %s443
        %s445 = sand.u32 %s140, 1
        %s446 = smul.addr %s445, 8
        %s447 = scalar_lea.vmem [#allocation6], %s446
        // Predicated region
        $region45: #{tpu_custom_call.1} parent=39 // pred_check
          %p448 = pneg %p150
        $region46: #{tpu_custom_call.1} parent=39 // pred_check_branch
          %450 = sbr.rel (%p448) target = $region48
        $region47: #{tpu_custom_call.1} parent=39 // pred_region
          %s452 = ssub.s32 128, 128
          %453 = vsyncadd %s444, %s452
          %s454 = smul.addr %s22, 2
          %s455 = smul.addr %s454, 64
          %s456 = scalar_lea.hbm %s5, %s455
          %s458 = sshll.u32 %s447, 4
          %s459 = int_to_ptr.vmem [resolvable:$true] %s458
          %461 = dma.vmem_to_hbm [thread:$0]  %s459, 128, %s456, %s444
        $region48: #{tpu_custom_call.1} parent=39 // pred_fallthru
          _
      $region40: #{tpu_custom_call.1} parent=5 // pred_fallthru
        _
      %p462 = scmp.le.s32.totalorder 2, %s17
      // Predicated region
      $region49: #{tpu_custom_call.1} parent=5 // pred_check
        %p463 = pneg %p462
      $region50: #{tpu_custom_call.1} parent=5 // pred_check_branch
        %465 = sbr.rel (%p463) target = $region52
      $region51: #{tpu_custom_call.1} parent=5 // pred_region
        %s466 = ssub.s32 %s17, 2
        // Predicated region
        $region53: #{tpu_custom_call.1} parent=51 // pred_check
          %p467 = pneg %p156
        $region54: #{tpu_custom_call.1} parent=51 // pred_check_branch
          %469 = sbr.rel (%p467) target = $region56
        $region55: #{tpu_custom_call.1} parent=51 // pred_region
          %s470 = sand.u32 %s141, 1
          %s471 = scalar_lea.sflag [#allocation5], %s470
          %s472 = sand.u32 %s141, 1
          %s473 = smul.addr %s472, 8
          %s474 = scalar_lea.vmem [#allocation6], %s473
          %475 = dma.done %s471, 128
        $region56: #{tpu_custom_call.1} parent=51 // pred_fallthru
          _
      $region52: #{tpu_custom_call.1} parent=5 // pred_fallthru
        _
    $region6: #{tpu_custom_call.1} parent=1 // loop_footer
      %s21 = sadd.s32 1, %s17
    $region7: #{tpu_custom_call.1} parent=1 // loop_footer_branch
      %16 = sbr.rel target = $region3
    $region8: #{tpu_custom_call.1} parent=1 // loop_exit
      _
    %476 = vsyncpa [#allocation4], 1
    %s477 = scalar_lea.sflag [#allocation4], 1
    %478 = vsyncpa %s477, 1
    %479 = vsyncpa [#allocation5], 1
    %s480 = scalar_lea.sflag [#allocation5], 1
    %481 = vsyncpa %s480, 1

</llo_original>
